<compile_context>
chip_gen: v7x
topology: tpu7x:2x2x1
jax: 0.10.0
libtpu: 0.0.40
codegen_flags: <defaults>
</compile_context>

<pallas_src>
import jax
import jax.numpy as jnp
from jax import lax
from jax.experimental import pallas as pl
from jax.experimental.pallas import tpu as pltpu

_LANES = 128        # lane width (last dim of every block)
_SUBLANES = 8       # f32 sublane tile
_CHUNK_ROWS = 256   # rows folded per inner-loop iteration (32 vregs/input)


def _fold_rows(p_ref, a_ref, nrows, chunk):
    """(8,128) f32 partial sum of (p-a)^2 over the first `nrows` rows of the
    current block.  `nrows` and `chunk` are static and multiples of 8."""
    n_full = nrows // chunk
    rem = nrows % chunk

    def chunk_sum(off, width):
        d = p_ref[pl.ds(off, width), :] - a_ref[pl.ds(off, width), :]
        sq = d * d
        # fold (width,128) -> (8,128) with pure VPU adds (vreg-aligned reshape)
        return sq.reshape(width // _SUBLANES, _SUBLANES, _LANES).sum(axis=0)

    acc = jnp.zeros((_SUBLANES, _LANES), jnp.float32)
    if n_full > 0:
        def body(c, a):
            off = pl.multiple_of(c * chunk, chunk)
            return a + chunk_sum(off, chunk)
        acc = lax.fori_loop(0, n_full, body, acc, unroll=True)
    if rem > 0:
        acc = acc + chunk_sum(n_full * chunk, rem)
    return acc


def _make_chi2_kernel(tr, num_tiles, tiles_per_core, rows_last, needs_gate):
    """Kernel body with all tiling constants baked in statically."""
    ragged = rows_last != tr  # last row-tile only partially covered by data

    def kernel(p_ref, a_ref, o_ref):
        core = pl.program_id(0)   # "parallel" axis (2-TC chips)
        step = pl.program_id(1)   # "arbitrary" reduction axis
        gtile = core * tiles_per_core + step  # global row-tile index

        # per-core accumulator init, keyed on this core's own reduction axis
        @pl.when(step == 0)
        def _():
            o_ref[...] = jnp.zeros_like(o_ref)

        def accum_full():
            o_ref[...] += _fold_rows(p_ref, a_ref, tr, _CHUNK_ROWS)

        def accum_last():
            # reads only the statically-known valid rows of the final tile;
            # the block-overhang garbage rows are never touched, so no mask
            # (select) is needed.
            o_ref[...] += _fold_rows(p_ref, a_ref, rows_last, _CHUNK_ROWS)

        if ragged:
            @pl.when(gtile < num_tiles - 1)   # unmasked fast path
            def _():
                accum_full()

            @pl.when(gtile == num_tiles - 1)  # tail tile only
            def _():
                accum_last()
        else:
            if needs_gate:
                # skip the clamped/duplicate tail step of the shorter core
                @pl.when(gtile < num_tiles)
                def _():
                    accum_full()
            else:
                accum_full()

    return kernel


def _chip_kind():
    try:
        return jax.devices()[0].device_kind.lower()
    except Exception:
        return ""


def chi_square(predicted, actual):
    """chi2 = ((predicted - actual) ** 2).sum()  -- returns an f32 scalar."""
    assert predicted.shape == actual.shape, "shape mismatch"

    p = jnp.ravel(predicted)
    a = jnp.ravel(actual)
    if p.dtype != jnp.float32:
        p = p.astype(jnp.float32)
    if a.dtype != jnp.float32:
        a = a.astype(jnp.float32)
    n = p.shape[0]

    # Pad only if the flat length is not a multiple of 8*128; the zero padding
    # contributes exactly (0-0)^2 = 0.  For multiples (including the demo)
    # this branch is dead, so no extra HBM pass is introduced.
    chunk = _SUBLANES * _LANES
    if n % chunk != 0:
        pad = chunk - n % chunk
        p = jnp.pad(p, (0, pad))
        a = jnp.pad(a, (0, pad))
        n = n + pad

    rows = n // _LANES                       # multiple of 8
    p2 = p.reshape(rows, _LANES)             # metadata-only reshape, no copy
    a2 = a.reshape(rows, _LANES)

    # --- generation-specific tiling -------------------------------------
    kind = _chip_kind()
    is_v5e = ("v5 lite" in kind) or ("v5e" in kind) or ("v5litepod" in kind)
    two_tc_chip = ("v7" in kind) or ("v4" in kind)   # 2 TensorCores / device
    max_block_rows = 4096 if is_v5e else 8192        # 2 MiB / 4 MiB per input block

    tr = min(max_block_rows, rows)           # block rows (always multiple of 8)
    num_tiles = pl.cdiv(rows, tr)            # row-tiles covering the data
    rows_last = rows - (num_tiles - 1) * tr  # valid rows in the final tile

    num_cores = 2 if (two_tc_chip and num_tiles >= 2) else 1
    tiles_per_core = pl.cdiv(num_tiles, num_cores)
    needs_gate = num_cores * tiles_per_core != num_tiles

    if needs_gate:
        # clamp so the block index is always in range; the kernel gates out
        # the duplicated tail iteration of the shorter core via pl.when
        def in_map(c, i):
            return (jnp.minimum(c * tiles_per_core + i, num_tiles - 1), 0)
    else:
        def in_map(c, i):
            return (c * tiles_per_core + i, 0)

    kernel = _make_chi2_kernel(tr, num_tiles, tiles_per_core, rows_last,
                               needs_gate)

    # double-buffered footprint: 2 inputs x 2 buffers x (tr*128*4) bytes
    block_bytes = tr * _LANES * 4
    vmem_limit = max(4 * block_bytes + (8 << 20), 32 << 20)

    cost = pl.CostEstimate(
        flops=2 * n,
        transcendentals=0,
        bytes_accessed=2 * n * 4 + num_cores * _SUBLANES * _LANES * 4,
    )

    partials = pl.pallas_call(
        kernel,
        out_shape=jax.ShapeDtypeStruct((num_cores * _SUBLANES, _LANES),
                                       jnp.float32),
        grid_spec=pltpu.PrefetchScalarGridSpec(
            num_scalar_prefetch=0,
            grid=(num_cores, tiles_per_core),
            in_specs=[
                pl.BlockSpec((tr, _LANES), in_map),
                pl.BlockSpec((tr, _LANES), in_map),
            ],
            out_specs=pl.BlockSpec((_SUBLANES, _LANES), lambda c, i: (c, 0)),
        ),
        compiler_params=pltpu.CompilerParams(
            dimension_semantics=("parallel", "arbitrary"),
            vmem_limit_bytes=vmem_limit,
        ),
        cost_estimate=cost,
    )(p2, a2)

    # single cross-lane reduction, once, outside the kernel's hot loop.
    # NOTE: plain f32 accumulation; for very large N expect ~1e-5-level drift
    # vs a float64 reference (fine for a training loss).
    return jnp.sum(partials)


if __name__ == "__main__":
    key = jax.random.PRNGKey(0)
    k1, k2 = jax.random.split(key)

    # small "data vector" shapes consistent with an emulator loss
    shape = (2, 4, 16, 16)
    predicted = jax.random.normal(k1, shape, dtype=jnp.float32)
    actual = jax.random.normal(k2, shape, dtype=jnp.float32)

    chi2 = jax.jit(chi_square)(predicted, actual)
    chi2 = jax.block_until_ready(chi2)

    # reference check
    ref = jnp.sum((predicted - actual) ** 2)
    assert jnp.allclose(chi2, ref, rtol=1e-5, atol=1e-5), (chi2, ref)

    print("KERNEL_OK")
</pallas_src>

<mosaic_0001>
module attributes {stable_mosaic.version = 11 : i64} {
  func.func @kernel(%arg0: i32, %arg1: i32, %arg2: memref<16x128xf32, #tpu.memory_space<vmem>>, %arg3: memref<16x128xf32, #tpu.memory_space<vmem>>, %arg4: memref<8x128xf32, #tpu.memory_space<vmem>>) attributes {dimension_semantics = [#tpu.dimension_semantics<parallel>, #tpu.dimension_semantics<arbitrary>], iteration_bounds = array<i64: 1, 1>, scalar_prefetch = 0 : i64, scratch_operands = 0 : i64, tpu.core_type = #tpu.core_type<tc>, window_params = [{transform_indices = @transform_0, window_bounds = array<i64: 16, 128>}, {transform_indices = @transform_1, window_bounds = array<i64: 16, 128>}, {transform_indices = @transform_2, window_bounds = array<i64: 8, 128>}]} {
    %c0_i32 = arith.constant 0 : i32
    %0 = arith.cmpi eq, %arg1, %c0_i32 : i32
    %1 = arith.extui %0 : i1 to i32
    %c0_i32_0 = arith.constant 0 : i32
    %2 = arith.cmpi ne, %1, %c0_i32_0 : i32
    scf.if %2 {
      %cst_9 = arith.constant 0.000000e+00 : f32
      %14 = vector.broadcast %cst_9 : f32 to vector<8x128xf32>
      %c0_10 = arith.constant 0 : index
      %c0_11 = arith.constant 0 : index
      %15 = vector.load %arg4[%c0_10, %c0_11] : memref<8x128xf32, #tpu.memory_space<vmem>>, vector<8x128xf32>
      tpu.vector_store %arg4[%c0_10, %c0_11], %14 {strides = array<i32>} : memref<8x128xf32, #tpu.memory_space<vmem>>, vector<8x128xf32>,
    } else {
    }
    %c0 = arith.constant 0 : index
    %c0_1 = arith.constant 0 : index
    %3 = vector.load %arg4[%c0, %c0_1] : memref<8x128xf32, #tpu.memory_space<vmem>>, vector<8x128xf32>
    %cst = arith.constant 0.000000e+00 : f32
    %4 = vector.broadcast %cst : f32 to vector<8x128xf32>
    %c0_2 = arith.constant 0 : index
    %c0_3 = arith.constant 0 : index
    %5 = vector.load %arg2[%c0_2, %c0_3] : memref<16x128xf32, #tpu.memory_space<vmem>>, vector<16x128xf32>
    %c0_4 = arith.constant 0 : index
    %c0_5 = arith.constant 0 : index
    %6 = vector.load %arg3[%c0_4, %c0_5] : memref<16x128xf32, #tpu.memory_space<vmem>>, vector<16x128xf32>
    %7 = arith.subf %5, %6 : vector<16x128xf32>
    %8 = arith.mulf %7, %7 : vector<16x128xf32>
    %9 = vector.shape_cast %8 : vector<16x128xf32> to vector<2x8x128xf32>
    %cst_6 = arith.constant dense<0.000000e+00> : vector<8x128xf32>
    %10 = vector.multi_reduction <add>, %9, %cst_6 [0] : vector<2x8x128xf32> to vector<8x128xf32>
    %11 = arith.addf %4, %10 : vector<8x128xf32>
    %12 = arith.addf %3, %11 : vector<8x128xf32>
    %c0_7 = arith.constant 0 : index
    %c0_8 = arith.constant 0 : index
    %13 = vector.load %arg4[%c0_7, %c0_8] : memref<8x128xf32, #tpu.memory_space<vmem>>, vector<8x128xf32>
    tpu.vector_store %arg4[%c0_7, %c0_8], %12 {strides = array<i32>} : memref<8x128xf32, #tpu.memory_space<vmem>>, vector<8x128xf32>,
    return
  }
  func.func @transform_0(%arg0: i32, %arg1: i32) -> (i32, i32) {
    %c1_i32 = arith.constant 1 : i32
    %0 = arith.muli %arg0, %c1_i32 : i32
    %1 = arith.addi %0, %arg1 : i32
    %c0_i32 = arith.constant 0 : i32
    %c0_i32_0 = arith.constant 0 : i32
    return %1, %c0_i32 : i32, i32
  }
  func.func @transform_1(%arg0: i32, %arg1: i32) -> (i32, i32) {
    %c1_i32 = arith.constant 1 : i32
    %0 = arith.muli %arg0, %c1_i32 : i32
    %1 = arith.addi %0, %arg1 : i32
    %c0_i32 = arith.constant 0 : i32
    %c0_i32_0 = arith.constant 0 : i32
    return %1, %c0_i32 : i32, i32
  }
  func.func @transform_2(%arg0: i32, %arg1: i32) -> (i32, i32) {
    %c0_i32 = arith.constant 0 : i32
    %c0_i32_0 = arith.constant 0 : i32
    return %arg0, %c0_i32 : i32, i32
  }
}

</mosaic_0001>

<llo_original>
// kernel: chi_square.1
$region0: #{chi_square.1}
  #allocation0 [shape = 'u32[]', space=smem, size = 0x4, offset = 0x4, fixed_abs, tag = 'smem constant byte address 0x4 - core index']
  #allocation1 [shape = 'u32[144,128]{1,0:T(1,128)}', space=vmem, size = 0x12000, scoped, tag = 'internal scratch']
  %s0 = inlined_call_operand.vmem [shape: f32[16,128], index: 0, kind: input, shape index: {}]
  %s1 = inlined_call_operand.vmem [shape: f32[16,128], index: 1, kind: input, shape index: {}]
  %s2 = inlined_call_operand.vmem [shape: f32[8,128], index: 2, kind: output, shape index: {}]
  %s3 = sld [smem:[#allocation0]]
  $region22: #{chi_square.1} parent=0
    _
  %s5 = ssub.s32 1, %s3
  %s6 = scalar_select 0, %s5, %s3
  // Predicated region
  $region2: #{chi_square.1} parent=0 // pred_check
    _
  $region3: #{chi_square.1} parent=0 // pred_check_branch
    %8 = sbr.rel (0) target = $region5
  $region4: #{chi_square.1} parent=0 // pred_region
    %s9 = sadd.s32 0, 0
    %s10 = smul.u32 2, %s9
    %p11 = scmp.lt.s32.totalorder %s10, 1
    %s12 = scalar_select %p11, %s10, 1
    %s13 = smul.addr %s12, 8
    %s14 = scalar_lea.vmem %s0, %s13
    %s15 = sadd.s32 0, 0
    %s16 = smul.u32 2, %s15
  $region5: #{chi_square.1} parent=0 // pred_fallthru
    _
  // Predicated region
  $region6: #{chi_square.1} parent=0 // pred_check
    _
  $region7: #{chi_square.1} parent=0 // pred_check_branch
    %18 = sbr.rel (0) target = $region9
  $region8: #{chi_square.1} parent=0 // pred_region
    %s19 = sadd.s32 0, 0
    %s20 = smul.u32 2, %s19
    %p21 = scmp.lt.s32.totalorder %s20, 1
    %s22 = scalar_select %p21, %s20, 1
    %s23 = smul.addr %s22, 8
    %s24 = scalar_lea.vmem %s1, %s23
    %s25 = sadd.s32 0, 0
    %s26 = smul.u32 2, %s25
  $region9: #{chi_square.1} parent=0 // pred_fallthru
    _
  %s27 = sadd.s32 0, 0
  %s28 = smul.u32 2, %s27
  %p29 = scmp.lt.s32.totalorder %s28, 1
  %s30 = scalar_select %p29, %s28, 1
  %s31 = smul.addr %s30, 8
  %s32 = scalar_lea.vmem %s0, %s31
  %s33 = sadd.s32 0, 0
  %s34 = smul.u32 2, %s33
  %p35 = scmp.lt.s32.totalorder %s34, 1
  %s36 = scalar_select %p35, %s34, 1
  %s37 = smul.addr %s36, 8
  %s38 = scalar_lea.vmem %s1, %s37
  %s39 = sadd.s32 0, 0
  %s40 = smul.u32 2, %s39
  %p41 = scmp.lt.s32.totalorder %s40, 1
  %s42 = scalar_select %p41, %s40, 1
  %s43 = smul.addr %s42, 8
  %s44 = scalar_lea.vmem %s0, %s43
  %s45 = sadd.s32 0, 0
  %s46 = smul.u32 2, %s45
  %s47 = sadd.s32 0, 0
  %s48 = smul.u32 2, %s47
  %p49 = scmp.lt.s32.totalorder %s48, 1
  %s50 = scalar_select %p49, %s48, 1
  %s51 = smul.addr %s50, 8
  %s52 = scalar_lea.vmem %s1, %s51
  %s53 = sadd.s32 0, 0
  %s54 = smul.u32 2, %s53
  %p55 = scmp.eq.s32.totalorder 0, 0
  // Predicated region
  $region10: #{chi_square.1} parent=0 // pred_check
    %p56 = pneg %p55
  $region11: #{chi_square.1} parent=0 // pred_check_branch
    %58 = sbr.rel (%p56) target = $region13
  $region12: #{chi_square.1} parent=0 // pred_region
    %59 = vst [vmem:[%s2] sm:$0xff] 0.0
  $region13: #{chi_square.1} parent=0 // pred_fallthru
    _
  %v60 = vld [vmem:[%s2] sm:$0xff]
  %v61 = vld [vmem:[%s44] sm:$0xff]
  %v62 = vld [vmem:[%s44 + $0x8] sm:$0xff]
  %v63 = vld [vmem:[%s52] sm:$0xff]
  %v64 = vld [vmem:[%s52 + $0x8] sm:$0xff]
  %v65 = vsub.f32 %v61, %v63
  %v66 = vsub.f32 %v62, %v64
  %v67 = vmul.f32 %v65, %v65
  %v68 = vmul.f32 %v66, %v66
  %v69 = vadd.f32 %v67, %v68
  %v70 = vadd.f32 %v69, 0.0
  %v71 = vadd.f32 %v60, %v70
  %72 = vst [vmem:[%s2] sm:$0xff] %v71
  // Predicated region
  $region14: #{chi_square.1} parent=0 // pred_check
    _
  $region15: #{chi_square.1} parent=0 // pred_check_branch
    %74 = sbr.rel (0) target = $region17
  $region16: #{chi_square.1} parent=0 // pred_region
    _
  $region17: #{chi_square.1} parent=0 // pred_fallthru
    _
  // Predicated region
  $region18: #{chi_square.1} parent=0 // pred_check
    _
  $region19: #{chi_square.1} parent=0 // pred_check_branch
    %76 = sbr.rel (0) target = $region21
  $region20: #{chi_square.1} parent=0 // pred_region
    _
  $region21: #{chi_square.1} parent=0 // pred_fallthru
    _

</llo_original>
